<compile_context>
chip_gen: v5e
topology: v5e:2x2
jax: 0.10.0
libtpu: 0.0.40
codegen_flags: <defaults>
</compile_context>

<pallas_src>
import jax
import jax.numpy as jnp
from jax.experimental import pallas as pl
from jax.experimental.pallas import tpu as pltpu


_F32_TEMPS = 8                 # conservative count of live (TB, C) f32 temporaries
_PAYLOAD_PER_INPUT = 2 << 20   # ~2 MiB per input per grid step


def _vmem_capacity_bytes() -> int:
    """Physical per-core VMEM; conservative v7x-sized fallback if the query fails."""
    try:
        cap = int(getattr(pltpu.get_tpu_info(), "vmem_capacity_bytes", 0))
        if cap > 0:
            return cap
    except Exception:
        pass
    return 64 << 20


def _choose_tile(B: int, C: int, dtype, block_rows=None):
    """Pick TB (rows per grid step) and the total number of batch tiles."""
    itemsize = jnp.dtype(dtype).itemsize
    sub = 16 if itemsize == 2 else 8              # sublane multiple for the block
    vmem_cap = _vmem_capacity_bytes()
    budget = min(vmem_cap // 2, 96 << 20)         # per-step VMEM budget
    # 2 inputs x 2 pipeline buffers (native dtype) + f32 compute temporaries.
    bytes_per_row = 2 * 2 * C * itemsize + _F32_TEMPS * C * 4
    tb_vmem_max = budget // bytes_per_row
    if tb_vmem_max < sub:
        # TODO(synk): class-axis tiling (streaming two-pass log-softmax) not implemented.
        raise ValueError(
            f"class dimension C={C} too large for a single-pass row tile "
            f"(need >= {sub} rows, VMEM budget allows {tb_vmem_max}).")
    if block_rows is None:
        # Payload-driven sizing: enough rows that each input moves ~2 MiB per step.
        tb = max(_PAYLOAD_PER_INPUT // (C * itemsize), sub)
    else:
        tb = int(block_rows)
    tb = min(tb, tb_vmem_max)
    tb = max(sub, (tb // sub) * sub)
    if tb >= B:
        return B, 1                                # single full-array tile
    return tb, pl.cdiv(B, tb)


def _make_distill_kernel(temperature, B, TB, C, tiles_per_shard, acc_rows, needs_mask):
    inv_T = 1.0 / float(temperature)

    def partial_sums(term):
        if acc_rows == 8:
            # (TB, C) -> (TB//8, 8, C) splits whole sublane tiles (no relayout); the
            # sum over the leading axis is plain VPU adds of (8, C) vreg slabs.
            return jnp.sum(term.reshape(TB // 8, 8, C), axis=0)
        return jnp.sum(term, axis=0, keepdims=True)

    def kernel(s_ref, t_ref, kl_out_ref, mse_out_ref, kl_acc, mse_acc):
        i = pl.program_id(1)

        @pl.when(i == 0)
        def _init():
            kl_acc[...] = jnp.zeros_like(kl_acc)
            mse_acc[...] = jnp.zeros_like(mse_acc)

        s = s_ref[...].astype(jnp.float32) * inv_T
        t = t_ref[...].astype(jnp.float32) * inv_T

        # Stable log-softmax(student / T) over the class axis (PyTorch dim=1).
        s_max = jnp.max(s, axis=1, keepdims=True)
        s_shift = s - s_max
        s_lse = jnp.log(jnp.sum(jnp.exp(s_shift), axis=1, keepdims=True))
        log_sp = s_shift - s_lse                    # log student probs

        # softmax(teacher / T) and its log (exact per-row reciprocal, VPU multiply).
        t_max = jnp.max(t, axis=1, keepdims=True)
        t_shift = t - t_max
        t_exp = jnp.exp(t_shift)
        t_sum = jnp.sum(t_exp, axis=1, keepdims=True)
        tp = t_exp * (1.0 / t_sum)                  # teacher probs
        log_tp = t_shift - jnp.log(t_sum)           # log teacher probs

        kl_term = tp * (log_tp - log_sp)            # KL integrand
        err = log_sp - tp
        mse_term = err * err                        # MSE integrand

        if needs_mask:
            # Unclamped global tile start (the index_map clamps the DMA in-bounds;
            # rows past B are garbage and must not reach the accumulators).  Only the
            # (at most one per shard) boundary/padded tile pays the mask.
            tile_start = (pl.program_id(0) * tiles_per_shard + i) * TB

            @pl.when(tile_start + TB <= B)
            def _full_tile():
                kl_acc[...] += partial_sums(kl_term)
                mse_acc[...] += partial_sums(mse_term)

            @pl.when(tile_start + TB > B)
            def _boundary_tile():
                row = tile_start + jax.lax.broadcasted_iota(jnp.int32, (TB, 1), 0)
                valid = row < B
                kl_acc[...] += partial_sums(jnp.where(valid, kl_term, 0.0))
                mse_acc[...] += partial_sums(jnp.where(valid, mse_term, 0.0))
        else:
            kl_acc[...] += partial_sums(kl_term)
            mse_acc[...] += partial_sums(mse_term)

        @pl.when(i == tiles_per_shard - 1)
        def _finalize():
            # Per-shard UNscaled partial sums; the cross-shard combine and the
            # batchmean / element-mean scaling happen in the JAX wrapper.
            kl_out_ref[0, 0] = jnp.sum(kl_acc[...])
            mse_out_ref[0, 0] = jnp.sum(mse_acc[...])

    return kernel


def distillation_loss(student_output, teacher_output, temperature: float = 3.0,
                      block_rows=None, num_core_shards: int = 2):
    """Returns (loss, loss1_kl, loss2_mse) as scalar f32 arrays.

    Matches the PyTorch DistillationLoss forward.  On HBM-limited v5e, feed bf16
    logits: the kernel upcasts to f32 internally, halving HBM traffic.
    """
    assert student_output.shape == teacher_output.shape
    assert student_output.dtype == teacher_output.dtype
    B, C = student_output.shape
    itemsize = jnp.dtype(student_output.dtype).itemsize

    TB, tiles_total = _choose_tile(B, C, student_output.dtype, block_rows)
    n_shards = max(1, min(int(num_core_shards), tiles_total))
    tiles_per_shard = pl.cdiv(tiles_total, n_shards)
    acc_rows = 8 if TB % 8 == 0 else 1
    needs_mask = (n_shards * tiles_per_shard * TB != B)

    kernel = _make_distill_kernel(temperature, B, TB, C,
                                  tiles_per_shard, acc_rows, needs_mask)

    def in_map(c, i):
        # Clamp padded tiles of the last shard so the DMA stays in-bounds; the
        # kernel masks their contribution using the unclamped index.
        return (jnp.minimum(c * tiles_per_shard + i, tiles_total - 1), 0)

    part_shape = jax.ShapeDtypeStruct((n_shards, 1), jnp.float32)
    part_spec = pl.BlockSpec((1, 1), lambda c, i: (c, 0), memory_space=pltpu.SMEM)

    vmem_cap = _vmem_capacity_bytes()
    est = (2 * 2 * TB * C * itemsize           # input double buffers
           + _F32_TEMPS * TB * C * 4           # f32 compute temporaries
           + 2 * acc_rows * C * 4)             # accumulators
    vmem_limit = int(min(max(int(est * 1.25) + (4 << 20), 32 << 20), vmem_cap))

    kl_parts, mse_parts = pl.pallas_call(
        kernel,
        out_shape=(part_shape, part_shape),
        grid_spec=pltpu.PrefetchScalarGridSpec(
            num_scalar_prefetch=0,
            grid=(n_shards, tiles_per_shard),
            in_specs=[
                pl.BlockSpec((TB, C), in_map),     # student logits tile
                pl.BlockSpec((TB, C), in_map),     # teacher logits tile
            ],
            out_specs=(part_spec, part_spec),
            scratch_shapes=[
                pltpu.VMEM((acc_rows, C), jnp.float32),   # KL partial sums
                pltpu.VMEM((acc_rows, C), jnp.float32),   # MSE partial sums
            ],
        ),
        compiler_params=pltpu.CompilerParams(
            dimension_semantics=("parallel", "arbitrary"),
            vmem_limit_bytes=vmem_limit,
        ),
    )(student_output, teacher_output)

    kl = jnp.sum(kl_parts) * (1.0 / B)           # KLDivLoss(reduction='batchmean')
    mse = jnp.sum(mse_parts) * (1.0 / (B * C))   # MSELoss() mean over all elements
    loss = kl + mse
    # TODO(synk): the PyTorch forward also does print(loss1.item(), loss2.item());
    # the individual losses are returned instead of printing from device code.
    return loss, kl, mse


def _reference(student_output, teacher_output, temperature: float = 3.0):
    s = student_output.astype(jnp.float32) / temperature
    t = teacher_output.astype(jnp.float32) / temperature
    log_sp = jax.nn.log_softmax(s, axis=1)
    tp = jax.nn.softmax(t, axis=1)
    log_tp = jax.nn.log_softmax(t, axis=1)
    kl = jnp.sum(tp * (log_tp - log_sp)) / s.shape[0]
    mse = jnp.mean((log_sp - tp) ** 2)
    return kl + mse, kl, mse


if __name__ == "__main__":
    key = jax.random.PRNGKey(0)
    k1, k2, k3, k4 = jax.random.split(key, 4)

    # Primary small case: (batch, classes) logits, single tile, single shard.
    B, C = 8, 128
    student = jax.random.normal(k1, (B, C), dtype=jnp.float32)
    teacher = jax.random.normal(k2, (B, C), dtype=jnp.float32)
    loss, l1, l2 = distillation_loss(student, teacher, temperature=3.0)
    jax.block_until_ready((loss, l1, l2))
    r_loss, r_l1, r_l2 = _reference(student, teacher, 3.0)
    assert jnp.allclose(loss, r_loss, rtol=1e-5, atol=1e-5)
    assert jnp.allclose(l1, r_l1, rtol=1e-5, atol=1e-5)
    assert jnp.allclose(l2, r_l2, rtol=1e-5, atol=1e-5)

    # Multi-tile, dual-shard, ragged path: 200 rows with 64-row tiles -> grid
    # (2 shards x 2 tiles); global tile 3 has only 8 valid rows (masked branch),
    # tiles 0-2 take the unmasked fast path.
    B2, C2 = 200, 256
    s2 = jax.random.normal(k3, (B2, C2), dtype=jnp.float32)
    t2 = jax.random.normal(k4, (B2, C2), dtype=jnp.float32)
    loss_b, l1_b, l2_b = distillation_loss(s2, t2, temperature=3.0, block_rows=64)
    jax.block_until_ready((loss_b, l1_b, l2_b))
    rb_loss, rb_l1, rb_l2 = _reference(s2, t2, 3.0)
    assert jnp.allclose(loss_b, rb_loss, rtol=1e-5, atol=1e-5)
    assert jnp.allclose(l1_b, rb_l1, rtol=1e-5, atol=1e-5)
    assert jnp.allclose(l2_b, rb_l2, rtol=1e-5, atol=1e-5)

    # bf16 logits (halves HBM traffic -- the recommended caller contract on v5e);
    # the f32 upcast happens inside the kernel.
    s3 = s2[:64].astype(jnp.bfloat16)
    t3 = t2[:64].astype(jnp.bfloat16)
    loss_c, l1_c, l2_c = distillation_loss(s3, t3, temperature=3.0)
    jax.block_until_ready((loss_c, l1_c, l2_c))
    rc_loss, rc_l1, rc_l2 = _reference(s3, t3, 3.0)
    assert jnp.allclose(loss_c, rc_loss, rtol=1e-5, atol=1e-5)
    assert jnp.allclose(l1_c, rc_l1, rtol=1e-5, atol=1e-5)
    assert jnp.allclose(l2_c, rc_l2, rtol=1e-5, atol=1e-5)

    print("KERNEL_OK")
</pallas_src>

<mosaic_0001>
module attributes {stable_mosaic.version = 11 : i64} {
  func.func @kernel(%arg0: i32, %arg1: i32, %arg2: memref<8x128xf32, #tpu.memory_space<vmem>>, %arg3: memref<8x128xf32, #tpu.memory_space<vmem>>, %arg4: memref<1x1xf32, #tpu.memory_space<smem>>, %arg5: memref<1x1xf32, #tpu.memory_space<smem>>, %arg6: memref<8x128xf32, #tpu.memory_space<vmem>>, %arg7: memref<8x128xf32, #tpu.memory_space<vmem>>) attributes {dimension_semantics = [#tpu.dimension_semantics<parallel>, #tpu.dimension_semantics<arbitrary>], iteration_bounds = array<i64: 1, 1>, scalar_prefetch = 0 : i64, scratch_operands = 2 : i64, tpu.core_type = #tpu.core_type<tc>, window_params = [{transform_indices = @transform_0, window_bounds = array<i64: 8, 128>}, {transform_indices = @transform_1, window_bounds = array<i64: 8, 128>}, {transform_indices = @transform_2, window_bounds = array<i64: 1, 1>}, {transform_indices = @transform_3, window_bounds = array<i64: 1, 1>}]} {
    %c0_i32 = arith.constant 0 : i32
    %0 = arith.cmpi eq, %arg1, %c0_i32 : i32
    %1 = arith.extui %0 : i1 to i32
    %c0_i32_0 = arith.constant 0 : i32
    %2 = arith.cmpi ne, %1, %c0_i32_0 : i32
    scf.if %2 {
      %cst_22 = arith.constant 0.000000e+00 : f32
      %50 = vector.broadcast %cst_22 : f32 to vector<8x128xf32>
      %c0_23 = arith.constant 0 : index
      %c0_24 = arith.constant 0 : index
      %51 = vector.load %arg6[%c0_23, %c0_24] : memref<8x128xf32, #tpu.memory_space<vmem>>, vector<8x128xf32>
      tpu.vector_store %arg6[%c0_23, %c0_24], %50 {strides = array<i32>} : memref<8x128xf32, #tpu.memory_space<vmem>>, vector<8x128xf32>,
      %cst_25 = arith.constant 0.000000e+00 : f32
      %52 = vector.broadcast %cst_25 : f32 to vector<8x128xf32>
      %c0_26 = arith.constant 0 : index
      %c0_27 = arith.constant 0 : index
      %53 = vector.load %arg7[%c0_26, %c0_27] : memref<8x128xf32, #tpu.memory_space<vmem>>, vector<8x128xf32>
      tpu.vector_store %arg7[%c0_26, %c0_27], %52 {strides = array<i32>} : memref<8x128xf32, #tpu.memory_space<vmem>>, vector<8x128xf32>,
    } else {
    }
    %c0 = arith.constant 0 : index
    %c0_1 = arith.constant 0 : index
    %3 = vector.load %arg2[%c0, %c0_1] : memref<8x128xf32, #tpu.memory_space<vmem>>, vector<8x128xf32>
    %cst = arith.constant 0.333333343 : f32
    %4 = vector.broadcast %cst : f32 to vector<8x128xf32>
    %5 = arith.mulf %3, %4 : vector<8x128xf32>
    %c0_2 = arith.constant 0 : index
    %c0_3 = arith.constant 0 : index
    %6 = vector.load %arg3[%c0_2, %c0_3] : memref<8x128xf32, #tpu.memory_space<vmem>>, vector<8x128xf32>
    %cst_4 = arith.constant 0.333333343 : f32
    %7 = vector.broadcast %cst_4 : f32 to vector<8x128xf32>
    %8 = arith.mulf %6, %7 : vector<8x128xf32>
    %cst_5 = arith.constant dense<0xFF800000> : vector<8xf32>
    %9 = vector.multi_reduction <maximumf>, %5, %cst_5 [1] : vector<8x128xf32> to vector<8xf32>
    %10 = vector.shape_cast %9 : vector<8xf32> to vector<8x1xf32>
    %11 = vector.broadcast %10 : vector<8x1xf32> to vector<8x128xf32>
    %12 = arith.subf %5, %11 : vector<8x128xf32>
    %13 = math.exp %12 : vector<8x128xf32>
    %cst_6 = arith.constant dense<0.000000e+00> : vector<8xf32>
    %14 = vector.multi_reduction <add>, %13, %cst_6 [1] : vector<8x128xf32> to vector<8xf32>
    %15 = vector.shape_cast %14 : vector<8xf32> to vector<8x1xf32>
    %16 = math.log %15 : vector<8x1xf32>
    %17 = vector.broadcast %16 : vector<8x1xf32> to vector<8x128xf32>
    %18 = arith.subf %12, %17 : vector<8x128xf32>
    %cst_7 = arith.constant dense<0xFF800000> : vector<8xf32>
    %19 = vector.multi_reduction <maximumf>, %8, %cst_7 [1] : vector<8x128xf32> to vector<8xf32>
    %20 = vector.shape_cast %19 : vector<8xf32> to vector<8x1xf32>
    %21 = vector.broadcast %20 : vector<8x1xf32> to vector<8x128xf32>
    %22 = arith.subf %8, %21 : vector<8x128xf32>
    %23 = math.exp %22 : vector<8x128xf32>
    %cst_8 = arith.constant dense<0.000000e+00> : vector<8xf32>
    %24 = vector.multi_reduction <add>, %23, %cst_8 [1] : vector<8x128xf32> to vector<8xf32>
    %25 = vector.shape_cast %24 : vector<8xf32> to vector<8x1xf32>
    %cst_9 = arith.constant 1.000000e+00 : f32
    %26 = vector.broadcast %cst_9 : f32 to vector<8x1xf32>
    %27 = arith.divf %26, %25 : vector<8x1xf32>
    %28 = vector.broadcast %27 : vector<8x1xf32> to vector<8x128xf32>
    %29 = arith.mulf %23, %28 : vector<8x128xf32>
    %30 = math.log %25 : vector<8x1xf32>
    %31 = vector.broadcast %30 : vector<8x1xf32> to vector<8x128xf32>
    %32 = arith.subf %22, %31 : vector<8x128xf32>
    %33 = arith.subf %32, %18 : vector<8x128xf32>
    %34 = arith.mulf %29, %33 : vector<8x128xf32>
    %35 = arith.subf %18, %29 : vector<8x128xf32>
    %36 = arith.mulf %35, %35 : vector<8x128xf32>
    %c0_10 = arith.constant 0 : index
    %c0_11 = arith.constant 0 : index
    %37 = vector.load %arg6[%c0_10, %c0_11] : memref<8x128xf32, #tpu.memory_space<vmem>>, vector<8x128xf32>
    %38 = vector.shape_cast %34 : vector<8x128xf32> to vector<1x8x128xf32>
    %cst_12 = arith.constant dense<0.000000e+00> : vector<8x128xf32>
    %39 = vector.multi_reduction <add>, %38, %cst_12 [0] : vector<1x8x128xf32> to vector<8x128xf32>
    %40 = arith.addf %37, %39 : vector<8x128xf32>
    %c0_13 = arith.constant 0 : index
    %c0_14 = arith.constant 0 : index
    %41 = vector.load %arg6[%c0_13, %c0_14] : memref<8x128xf32, #tpu.memory_space<vmem>>, vector<8x128xf32>
    tpu.vector_store %arg6[%c0_13, %c0_14], %40 {strides = array<i32>} : memref<8x128xf32, #tpu.memory_space<vmem>>, vector<8x128xf32>,
    %c0_15 = arith.constant 0 : index
    %c0_16 = arith.constant 0 : index
    %42 = vector.load %arg7[%c0_15, %c0_16] : memref<8x128xf32, #tpu.memory_space<vmem>>, vector<8x128xf32>
    %43 = vector.shape_cast %36 : vector<8x128xf32> to vector<1x8x128xf32>
    %cst_17 = arith.constant dense<0.000000e+00> : vector<8x128xf32>
    %44 = vector.multi_reduction <add>, %43, %cst_17 [0] : vector<1x8x128xf32> to vector<8x128xf32>
    %45 = arith.addf %42, %44 : vector<8x128xf32>
    %c0_18 = arith.constant 0 : index
    %c0_19 = arith.constant 0 : index
    %46 = vector.load %arg7[%c0_18, %c0_19] : memref<8x128xf32, #tpu.memory_space<vmem>>, vector<8x128xf32>
    tpu.vector_store %arg7[%c0_18, %c0_19], %45 {strides = array<i32>} : memref<8x128xf32, #tpu.memory_space<vmem>>, vector<8x128xf32>,
    %c0_i32_20 = arith.constant 0 : i32
    %47 = arith.cmpi eq, %arg1, %c0_i32_20 : i32
    %48 = arith.extui %47 : i1 to i32
    %c0_i32_21 = arith.constant 0 : i32
    %49 = arith.cmpi ne, %48, %c0_i32_21 : i32
    scf.if %49 {
      %c0_22 = arith.constant 0 : index
      %c0_23 = arith.constant 0 : index
      %50 = vector.load %arg6[%c0_22, %c0_23] : memref<8x128xf32, #tpu.memory_space<vmem>>, vector<8x128xf32>
      %51 = vector.shape_cast %50 : vector<8x128xf32> to vector<1x8x128xf32>
      %cst_24 = arith.constant dense<0.000000e+00> : vector<1xf32>
      %52 = vector.multi_reduction <add>, %51, %cst_24 [1, 2] : vector<1x8x128xf32> to vector<1xf32>
      %53 = vector.shape_cast %52 : vector<1xf32> to vector<1x1x1xf32>
      %54 = vector.extract %53[0, 0, 0] : f32 from vector<1x1x1xf32>
      %c0_25 = arith.constant 0 : index
      %c0_26 = arith.constant 0 : index
      %55 = memref.load %arg4[%c0_25, %c0_26] : memref<1x1xf32, #tpu.memory_space<smem>>
      memref.store %54, %arg4[%c0_25, %c0_26] : memref<1x1xf32, #tpu.memory_space<smem>>
      %c0_27 = arith.constant 0 : index
      %c0_28 = arith.constant 0 : index
      %56 = vector.load %arg7[%c0_27, %c0_28] : memref<8x128xf32, #tpu.memory_space<vmem>>, vector<8x128xf32>
      %57 = vector.shape_cast %56 : vector<8x128xf32> to vector<1x8x128xf32>
      %cst_29 = arith.constant dense<0.000000e+00> : vector<1xf32>
      %58 = vector.multi_reduction <add>, %57, %cst_29 [1, 2] : vector<1x8x128xf32> to vector<1xf32>
      %59 = vector.shape_cast %58 : vector<1xf32> to vector<1x1x1xf32>
      %60 = vector.extract %59[0, 0, 0] : f32 from vector<1x1x1xf32>
      %c0_30 = arith.constant 0 : index
      %c0_31 = arith.constant 0 : index
      %61 = memref.load %arg5[%c0_30, %c0_31] : memref<1x1xf32, #tpu.memory_space<smem>>
      memref.store %60, %arg5[%c0_30, %c0_31] : memref<1x1xf32, #tpu.memory_space<smem>>
    } else {
    }
    return
  }
  func.func @transform_0(%arg0: i32, %arg1: i32) -> (i32, i32) {
    %c1_i32 = arith.constant 1 : i32
    %0 = arith.muli %arg0, %c1_i32 : i32
    %1 = arith.addi %0, %arg1 : i32
    %c0_i32 = arith.constant 0 : i32
    %2 = arith.minsi %1, %c0_i32 : i32
    %c0_i32_0 = arith.constant 0 : i32
    %c0_i32_1 = arith.constant 0 : i32
    return %2, %c0_i32_0 : i32, i32
  }
  func.func @transform_1(%arg0: i32, %arg1: i32) -> (i32, i32) {
    %c1_i32 = arith.constant 1 : i32
    %0 = arith.muli %arg0, %c1_i32 : i32
    %1 = arith.addi %0, %arg1 : i32
    %c0_i32 = arith.constant 0 : i32
    %2 = arith.minsi %1, %c0_i32 : i32
    %c0_i32_0 = arith.constant 0 : i32
    %c0_i32_1 = arith.constant 0 : i32
    return %2, %c0_i32_0 : i32, i32
  }
  func.func @transform_2(%arg0: i32, %arg1: i32) -> (i32, i32) {
    %c0_i32 = arith.constant 0 : i32
    %c0_i32_0 = arith.constant 0 : i32
    return %arg0, %c0_i32 : i32, i32
  }
  func.func @transform_3(%arg0: i32, %arg1: i32) -> (i32, i32) {
    %c0_i32 = arith.constant 0 : i32
    %c0_i32_0 = arith.constant 0 : i32
    return %arg0, %c0_i32 : i32, i32
  }
}

</mosaic_0001>

<llo_original>
// kernel: tpu_custom_call.1
$region0: #{tpu_custom_call.1}
  #allocation0 [shape = 'u32[]', space=smem, size = 0x4, offset = 0x4, fixed_abs, tag = 'smem constant byte address 0x4 - core index']
  #allocation1 [shape = 'u32[72,128]{1,0:T(1,128)}', space=vmem, size = 0x9000, scoped, tag = 'internal scratch']
  #allocation2 [shape = 'f32[8,128]{1,0:T(8,128)}', space=vmem, size = 0x1000, scoped, tag = 'scratch operand']
  #allocation3 [shape = 'f32[8,128]{1,0:T(8,128)}', space=vmem, size = 0x1000, scoped, tag = 'scratch operand']
  %s0 = inlined_call_operand.hbm [shape: f32[8,128], index: 0, kind: input, shape index: {}]
  %s1 = inlined_call_operand.hbm [shape: f32[8,128], index: 1, kind: input, shape index: {}]
  %s2 = inlined_call_operand.hbm [shape: f32[1,1], index: 2, kind: output, shape index: {0}]
  %s3 = inlined_call_operand.hbm [shape: f32[1,1], index: 3, kind: output, shape index: {1}]
  %4 = xla_tuple %s2, %s3
  %s5 = sld [smem:[#allocation0]]
  $region42: #{tpu_custom_call.1} parent=0
    _
  %s7 = ssub.s32 1, %s5
  %s8 = scalar_select 0, %s7, %s5
  $region1: #{tpu_custom_call.1} parent=0
    #allocation4 [shape = 'u8[4096]{0}', space=vmem, size = 0x1000, scoped, tag = 'input window, operand 0, single buffered']
    #allocation5 [shape = 's32[1]{0}', space=sflag, size = 0x4, scoped, tag = 'scoped memory for tpu_custom_call.1']
    #allocation6 [shape = 's32[1]{0}', space=sflag, size = 0x4, scoped, tag = 'scoped memory for tpu_custom_call.1']
    #allocation7 [shape = 'u8[4096]{0}', space=vmem, size = 0x1000, scoped, tag = 'input window, operand 1, single buffered']
    #allocation8 [shape = 's32[1]{0}', space=sflag, size = 0x4, scoped, tag = 'scoped memory for tpu_custom_call.1']
    #allocation9 [shape = 'u8[512]{0}', space=smem, size = 0x200, scoped, tag = 'output window, operand 0, single buffered']
    #allocation10 [shape = 'u8[512]{0}', space=smem, size = 0x200, scoped, tag = 'output window, operand 1, single buffered']
    #allocation11 [shape = 's32[1]{0}', space=sflag, size = 0x4, scoped, tag = 'scoped memory for tpu_custom_call.1']
    %9 = vsyncpa [#allocation5], 0
    %10 = vsyncpa [#allocation8], 0
    %11 = vsyncpa [#allocation6], 0
    %12 = vsyncpa [#allocation11], 0
    // Predicated region
    $region2: #{tpu_custom_call.1} parent=1 // pred_check
      _
    $region3: #{tpu_custom_call.1} parent=1 // pred_check_branch
      %14 = sbr.rel (0) target = $region5
    $region4: #{tpu_custom_call.1} parent=1 // pred_region
      %s15 = sadd.s32 0, 0
      %p16 = scmp.lt.s32.totalorder %s15, 0
      %s17 = scalar_select %p16, %s15, 0
      %19 = vsyncadd [#allocation5], 0
      %s20 = smul.addr %s17, 8
      %s21 = scalar_lea.hbm %s0, %s20
      %s23 = sshll.u32 %s21, 4
      %s24 = int_to_ptr.hbm [resolvable:$true] %s23
      %s25 = sshll.u32 [#allocation4], 4
      %s26 = int_to_ptr.vmem [resolvable:$true] %s25
      %28 = dma.hbm_to_vmem [thread:$0]  %s24, 128, %s26, [#allocation5]
    $region5: #{tpu_custom_call.1} parent=1 // pred_fallthru
      _
    // Predicated region
    $region6: #{tpu_custom_call.1} parent=1 // pred_check
      _
    $region7: #{tpu_custom_call.1} parent=1 // pred_check_branch
      %30 = sbr.rel (0) target = $region9
    $region8: #{tpu_custom_call.1} parent=1 // pred_region
      %s31 = sadd.s32 0, 0
      %p32 = scmp.lt.s32.totalorder %s31, 0
      %s33 = scalar_select %p32, %s31, 0
      %35 = vsyncadd [#allocation8], 0
      %s36 = smul.addr %s33, 8
      %s37 = scalar_lea.hbm %s1, %s36
      %s39 = sshll.u32 %s37, 4
      %s40 = int_to_ptr.hbm [resolvable:$true] %s39
      %s41 = sshll.u32 [#allocation7], 4
      %s42 = int_to_ptr.vmem [resolvable:$true] %s41
      %44 = dma.hbm_to_vmem [thread:$0]  %s40, 128, %s42, [#allocation8]
    $region9: #{tpu_custom_call.1} parent=1 // pred_fallthru
      _
    // Predicated region
    $region10: #{tpu_custom_call.1} parent=1 // pred_check
      _
    $region11: #{tpu_custom_call.1} parent=1 // pred_check_branch
      %46 = sbr.rel (0) target = $region13
    $region12: #{tpu_custom_call.1} parent=1 // pred_region
      %48 = dma.done [#allocation5], 128
    $region13: #{tpu_custom_call.1} parent=1 // pred_fallthru
      _
    // Predicated region
    $region14: #{tpu_custom_call.1} parent=1 // pred_check
      _
    $region15: #{tpu_custom_call.1} parent=1 // pred_check_branch
      %50 = sbr.rel (0) target = $region17
    $region16: #{tpu_custom_call.1} parent=1 // pred_region
      %52 = dma.done [#allocation8], 128
    $region17: #{tpu_custom_call.1} parent=1 // pred_fallthru
      _
    %s53 = sadd.s32 0, 0
    %p54 = scmp.lt.s32.totalorder %s53, 0
    %s55 = scalar_select %p54, %s53, 0
    %s56 = sadd.s32 0, 0
    %p57 = scmp.lt.s32.totalorder %s56, 0
    %s58 = scalar_select %p57, %s56, 0
    %p59 = scmp.eq.s32.totalorder 0, 0
    // Predicated region
    $region18: #{tpu_custom_call.1} parent=1 // pred_check
      %p60 = pneg %p59
    $region19: #{tpu_custom_call.1} parent=1 // pred_check_branch
      %62 = sbr.rel (%p60) target = $region21
    $region20: #{tpu_custom_call.1} parent=1 // pred_region
      %63 = vst [vmem:[#allocation2] sm:$0xff] 0.0
      %64 = vst [vmem:[#allocation3] sm:$0xff] 0.0
    $region21: #{tpu_custom_call.1} parent=1 // pred_fallthru
      _
    %v65 = vld [vmem:[#allocation4] sm:$0xff]
    %v66 = vmul.f32 %v65, 0.33333334
    %v67 = vld [vmem:[#allocation7] sm:$0xff]
    %v68 = vmul.f32 %v67, 0.33333334
    %69 = vmax.xlane.f32.xlu0 %v66
    %v70 = vpop.xlane.xlu0 %69
    %v71 = vsub.f32 %v66, %v70
    %v72 = vmul.f32 %v71, 1.442695
    %v73 = vpow.pop %v72
    %74 = vadd.xlane.f32.xlu0 %v73
    %v75 = vpop.xlane.xlu0 %74
    %v76 = vlog2.pop %v75
    %v77 = vmul.f32 %v76, 0.6931472
    %v78 = vsub.f32 %v71, %v77
    %79 = vmax.xlane.f32.xlu0 %v68
    %v80 = vpop.xlane.xlu0 %79
    %v81 = vsub.f32 %v68, %v80
    %v82 = vmul.f32 %v81, 1.442695
    %v83 = vpow.pop %v82
    %84 = vadd.xlane.f32.xlu0 %v83
    %v85 = vpop.xlane.xlu0 %84
    %v86 = vrcp.pop %v85
    %v87 = vmul.f32 %v85, %v86
    %v88 = vsub.f32 1.0, %v87
    %v89 = vmul.f32 %v86, %v88
    %v90 = vadd.f32 %v86, %v89
    %vm91 = vweird.f32 %v85
    %vm92 = vweird.f32 %v86
    %vm93 = vmor %vm91, %vm92
    %v94 = vsel %vm93, %v86, %v90
    %v95 = vand.u32 2147483647, %v85
    %vm96 = vcmp.eq.f32.partialorder %v95, 8.507059e+37
    %v97 = vand.u32 %v85, 2147483648
    %v98 = vor.u32 1.1754944e-38, %v97
    %v99 = vsel %vm96, %v98, %v94
    %v100 = vmul.f32 1.0, %v99
    %v101 = vmul.f32 %v83, %v100
    %v102 = vlog2.pop %v85
    %v103 = vmul.f32 %v102, 0.6931472
    %v104 = vsub.f32 %v81, %v103
    %v105 = vsub.f32 %v104, %v78
    %v106 = vmul.f32 %v101, %v105
    %v107 = vsub.f32 %v78, %v101
    %v108 = vmul.f32 %v107, %v107
    %v109 = vld [vmem:[#allocation2] sm:$0xff]
    %v110 = vadd.f32 %v106, 0.0
    %v111 = vadd.f32 %v109, %v110
    %112 = vst [vmem:[#allocation2] sm:$0xff] %v111
    %v113 = vld [vmem:[#allocation3] sm:$0xff]
    %v114 = vadd.f32 %v108, 0.0
    %v115 = vadd.f32 %v113, %v114
    %116 = vst [vmem:[#allocation3] sm:$0xff] %v115
    // Predicated region
    $region22: #{tpu_custom_call.1} parent=1 // pred_check
      %p117 = pneg %p59
    $region23: #{tpu_custom_call.1} parent=1 // pred_check_branch
      %119 = sbr.rel (%p117) target = $region25
    $region24: #{tpu_custom_call.1} parent=1 // pred_region
      %v120 = vld [vmem:[#allocation2] sm:$0xff]
      %121 = vadd.xlane.f32.xlu0 %v120
      %v122 = vpop.xlane.xlu0 %121
      %v123 = vrot.slane %v122, 4
      %v124 = vadd.f32 %v122, %v123
      %v125 = vrot.slane %v124, 2
      %v126 = vadd.f32 %v124, %v125
      %v127 = vrot.slane %v126, 1
      %v128 = vadd.f32 %v126, %v127
      %s129 = vtos %v128
      %s130 = scalar_lea.smem [#allocation9], 0
      %131 = sst [smem:[%s130]] %s129
      %v132 = vld [vmem:[#allocation3] sm:$0xff]
      %133 = vadd.xlane.f32.xlu0 %v132
      %v134 = vpop.xlane.xlu0 %133
      %v135 = vrot.slane %v134, 4
      %v136 = vadd.f32 %v134, %v135
      %v137 = vrot.slane %v136, 2
      %v138 = vadd.f32 %v136, %v137
      %v139 = vrot.slane %v138, 1
      %v140 = vadd.f32 %v138, %v139
      %s141 = vtos %v140
      %s142 = scalar_lea.smem [#allocation10], 0
      %143 = sst [smem:[%s142]] %s141
    $region25: #{tpu_custom_call.1} parent=1 // pred_fallthru
      _
    // Predicated region
    $region26: #{tpu_custom_call.1} parent=1 // pred_check
      _
    $region27: #{tpu_custom_call.1} parent=1 // pred_check_branch
      %145 = sbr.rel (0) target = $region29
    $region28: #{tpu_custom_call.1} parent=1 // pred_region
      %147 = vsyncadd [#allocation6], 0
      %s149 = sshll.u32 %s2, 4
      %s150 = int_to_ptr.hbm [resolvable:$true] %s149
      %152 = dma.smem_to_hbm [#allocation9], 16, %s150, [#allocation6]
    $region29: #{tpu_custom_call.1} parent=1 // pred_fallthru
      _
    // Predicated region
    $region30: #{tpu_custom_call.1} parent=1 // pred_check
      _
    $region31: #{tpu_custom_call.1} parent=1 // pred_check_branch
      %154 = sbr.rel (0) target = $region33
    $region32: #{tpu_custom_call.1} parent=1 // pred_region
      %156 = vsyncadd [#allocation11], 0
      %s158 = sshll.u32 %s3, 4
      %s159 = int_to_ptr.hbm [resolvable:$true] %s158
      %161 = dma.smem_to_hbm [#allocation10], 16, %s159, [#allocation11]
    $region33: #{tpu_custom_call.1} parent=1 // pred_fallthru
      _
    // Predicated region
    $region34: #{tpu_custom_call.1} parent=1 // pred_check
      _
    $region35: #{tpu_custom_call.1} parent=1 // pred_check_branch
      %163 = sbr.rel (0) target = $region37
    $region36: #{tpu_custom_call.1} parent=1 // pred_region
      %165 = dma.done [#allocation6], 16
    $region37: #{tpu_custom_call.1} parent=1 // pred_fallthru
      _
    // Predicated region
    $region38: #{tpu_custom_call.1} parent=1 // pred_check
      _
    $region39: #{tpu_custom_call.1} parent=1 // pred_check_branch
      %167 = sbr.rel (0) target = $region41
    $region40: #{tpu_custom_call.1} parent=1 // pred_region
      %169 = dma.done [#allocation11], 16
    $region41: #{tpu_custom_call.1} parent=1 // pred_fallthru
      _
    %170 = sfence
    %171 = vsyncpa [#allocation5], 1
    %172 = vsyncpa [#allocation8], 1
    %173 = vsyncpa [#allocation6], 1
    %174 = vsyncpa [#allocation11], 1

</llo_original>
